<compile_context>
chip_gen: v5e
topology: v5e:2x2
jax: 0.10.0
libtpu: 0.0.40
codegen_flags: <defaults>
</compile_context>

<pallas_src>
import math

import jax
import jax.numpy as jnp
from jax.experimental import pallas as pl
from jax.experimental.pallas import tpu as pltpu

IN_FEATURES = 768
OUT_FEATURES = 256
CLAMP_MIN = 0.05
CLAMP_MAX = 0.8


# ----------------------------- kernels --------------------------------------

def _linear_clamp_kernel_bf16w(x_ref, w_ref, b_ref, o_ref):
    # x arrives as f32; cast to bf16 inside the kernel (cheap VPU op, hidden
    # under the DMA).  bf16 x bf16 MXU matmul with f32 accumulation.
    x = x_ref[...].astype(jnp.bfloat16)
    acc = jnp.dot(x, w_ref[...], preferred_element_type=jnp.float32)
    acc = acc + b_ref[...]                      # (1, N) bias broadcasts
    acc = jnp.minimum(jnp.maximum(acc, CLAMP_MIN), CLAMP_MAX)
    o_ref[...] = acc.astype(o_ref.dtype)


def _linear_clamp_kernel_int8w(x_ref, w_ref, s_ref, b_ref, o_ref):
    # int8 weight streamed from HBM (half the bytes of bf16).  Dequant is a
    # per-output-channel scale applied in the epilogue; the dot operands are
    # bf16 so this lowers identically on v5e/v6e/v7x.
    x = x_ref[...].astype(jnp.bfloat16)
    w = w_ref[...].astype(jnp.bfloat16)         # |q| <= 127 -> exact in bf16
    acc = jnp.dot(x, w, preferred_element_type=jnp.float32)
    acc = acc * s_ref[...] + b_ref[...]         # fold dequant into bias add
    acc = jnp.minimum(jnp.maximum(acc, CLAMP_MIN), CLAMP_MAX)
    o_ref[...] = acc.astype(o_ref.dtype)


# -------------------------- parameter prep (once) ---------------------------

def prep_params_bf16(w, b):
    """w: (N, K) as stored by torch.nn.Linear, b: (N,)."""
    return {
        "kind": "bf16",
        "w_t": jnp.asarray(w, jnp.float32).T.astype(jnp.bfloat16),   # (K, N)
        "b": jnp.asarray(b, jnp.float32).reshape(1, -1),             # (1, N)
    }


def prep_params_int8(w, b):
    """Symmetric per-output-channel int8 quantization of the weight."""
    w_t = jnp.asarray(w, jnp.float32).T                              # (K, N)
    absmax = jnp.max(jnp.abs(w_t), axis=0, keepdims=True)            # (1, N)
    scale = jnp.where(absmax > 0, absmax / 127.0, 1.0)
    q = jnp.clip(jnp.round(w_t / scale), -127, 127).astype(jnp.int8)
    return {
        "kind": "int8",
        "w_t": q,                                                    # (K, N) i8
        "scale": scale.astype(jnp.float32),                          # (1, N)
        "b": jnp.asarray(b, jnp.float32).reshape(1, -1),             # (1, N)
    }


# ------------------------------ wrapper --------------------------------------

def _round_up(x, m):
    return ((x + m - 1) // m) * m


def _pick_row_tile(m, tm_max):
    # Big enough to amortize ~0.35us/step overhead, small enough that the
    # grid has >=2 steps so "parallel" can shard rows across v7x's two TCs.
    tm = min(tm_max, _round_up(pl.cdiv(m, 2), 16))
    return max(tm, 16)


def linear_clamp(x, params, *, tm_max=512, out_dtype=jnp.float32,
                 small_m_fast_path=256):
    """x: (M, K) f32, params from prep_params_*  ->  (M, N) out_dtype."""
    M, K = x.shape
    w_t = params["w_t"]
    Kw, N = w_t.shape
    assert K == Kw
    b = params["b"]
    quantized = params["kind"] == "int8"

    kernel = _linear_clamp_kernel_int8w if quantized else _linear_clamp_kernel_bf16w
    extra_ops = (params["scale"],) if quantized else ()

    cost = pl.CostEstimate(
        flops=2 * M * K * N,
        transcendentals=0,
        bytes_accessed=(x.size * x.dtype.itemsize
                        + w_t.size * w_t.dtype.itemsize
                        + (params["scale"].size * 4 if quantized else 0)
                        + b.size * 4
                        + M * N * jnp.dtype(out_dtype).itemsize),
    )

    if M <= small_m_fast_path:
        # Whole problem in one block: no grid, no pipeline prologue/epilogue,
        # no double-buffering of a weight that never changes.
        in_specs = [pl.BlockSpec((M, K), lambda: (0, 0)),
                    pl.BlockSpec((K, N), lambda: (0, 0))]
        if quantized:
            in_specs.append(pl.BlockSpec((1, N), lambda: (0, 0)))
        in_specs.append(pl.BlockSpec((1, N), lambda: (0, 0)))
        return pl.pallas_call(
            kernel,
            out_shape=jax.ShapeDtypeStruct((M, N), out_dtype),
            in_specs=in_specs,
            out_specs=pl.BlockSpec((M, N), lambda: (0, 0)),
            cost_estimate=cost,
        )(x, w_t, *extra_ops, b)

    # Batched path: tile only M; weight/scale/bias blocks keep index (0, 0)
    # so they stay VMEM-resident across grid steps.  K is not tiled.
    tm = _pick_row_tile(M, tm_max)
    in_specs = [pl.BlockSpec((tm, K), lambda i: (i, 0)),
                pl.BlockSpec((K, N), lambda i: (0, 0))]
    if quantized:
        in_specs.append(pl.BlockSpec((1, N), lambda i: (0, 0)))
    in_specs.append(pl.BlockSpec((1, N), lambda i: (0, 0)))
    return pl.pallas_call(
        kernel,
        out_shape=jax.ShapeDtypeStruct((M, N), out_dtype),
        grid=(pl.cdiv(M, tm),),
        in_specs=in_specs,
        out_specs=pl.BlockSpec((tm, N), lambda i: (i, 0)),
        compiler_params=pltpu.CompilerParams(
            dimension_semantics=("parallel",),
        ),
        cost_estimate=cost,
    )(x, w_t, *extra_ops, b)


# ------------------------------- test ----------------------------------------

if __name__ == "__main__":
    key = jax.random.PRNGKey(0)
    kx, kw, kb, kx2 = jax.random.split(key, 4)

    # PyTorch nn.Linear(768, 256)-style uniform init.
    bound = 1.0 / math.sqrt(IN_FEATURES)
    w = jax.random.uniform(kw, (OUT_FEATURES, IN_FEATURES), jnp.float32,
                           minval=-bound, maxval=bound)   # (256, 768) like nn.Linear
    b = jax.random.uniform(kb, (OUT_FEATURES,), jnp.float32,
                           minval=-bound, maxval=bound)

    # Parameter prep done ONCE (not per call).
    p_bf16 = prep_params_bf16(w, b)
    p_int8 = prep_params_int8(w, b)     # halves weight HBM bytes (mem-bound op)

    def ref(xv):
        return jnp.clip(xv @ w.T + b, CLAMP_MIN, CLAMP_MAX)

    # --- spec shape: x1 = (1, 768) -> single-block fast path -----------------
    x1 = jax.random.normal(kx, (1, IN_FEATURES), jnp.float32)

    out = jax.block_until_ready(linear_clamp(x1, p_bf16))
    assert out.shape == (1, OUT_FEATURES) and out.dtype == jnp.float32
    err = float(jnp.max(jnp.abs(out - ref(x1))))
    assert jnp.allclose(out, ref(x1), atol=2e-2, rtol=2e-2), err

    out_q = jax.block_until_ready(linear_clamp(x1, p_int8))
    err_q = float(jnp.max(jnp.abs(out_q - ref(x1))))
    assert jnp.allclose(out_q, ref(x1), atol=3e-2, rtol=3e-2), err_q

    # --- batched case exercising the tiled grid path (2 steps, partial last) -
    xb = jax.random.normal(kx2, (648, IN_FEATURES), jnp.float32)
    out_b = jax.block_until_ready(linear_clamp(xb, p_bf16))
    assert out_b.shape == (648, OUT_FEATURES)
    err_b = float(jnp.max(jnp.abs(out_b - ref(xb))))
    assert jnp.allclose(out_b, ref(xb), atol=2e-2, rtol=2e-2), err_b

    print("KERNEL_OK")
</pallas_src>

<mosaic_0001>
module attributes {stable_mosaic.version = 11 : i64} {
  func.func @_linear_clamp_kernel_bf16w(%arg0: memref<1x768xf32, #tpu.memory_space<vmem>>, %arg1: memref<768x256xbf16, #tpu.memory_space<vmem>>, %arg2: memref<1x256xf32, #tpu.memory_space<vmem>>, %arg3: memref<1x256xf32, #tpu.memory_space<vmem>>) attributes {dimension_semantics = [], scalar_prefetch = 0 : i64, scratch_operands = 0 : i64, tpu.core_type = #tpu.core_type<tc>} {
    %c0 = arith.constant 0 : index
    %c0_0 = arith.constant 0 : index
    %0 = vector.load %arg0[%c0, %c0_0] : memref<1x768xf32, #tpu.memory_space<vmem>>, vector<1x768xf32>
    %1 = arith.truncf %0 : vector<1x768xf32> to vector<1x768xbf16>
    %c0_1 = arith.constant 0 : index
    %c0_2 = arith.constant 0 : index
    %2 = vector.load %arg1[%c0_1, %c0_2] : memref<768x256xbf16, #tpu.memory_space<vmem>>, vector<768x256xbf16>
    %cst = arith.constant dense<0.000000e+00> : vector<1x256xf32>
    %3 = tpu.matmul %1, %2, %cst {dimension_numbers = #tpu.dot_dimension_numbers<[1], [0], [0], [1], [0, 0, 1, 1], [], []>} : vector<1x768xbf16>, vector<768x256xbf16>, vector<1x256xf32> -> vector<1x256xf32>
    %c0_3 = arith.constant 0 : index
    %c0_4 = arith.constant 0 : index
    %4 = vector.load %arg2[%c0_3, %c0_4] : memref<1x256xf32, #tpu.memory_space<vmem>>, vector<1x256xf32>
    %5 = arith.addf %3, %4 : vector<1x256xf32>
    %cst_5 = arith.constant 5.000000e-02 : f32
    %6 = vector.broadcast %cst_5 : f32 to vector<1x256xf32>
    %7 = arith.maximumf %5, %6 : vector<1x256xf32>
    %cst_6 = arith.constant 8.000000e-01 : f32
    %8 = vector.broadcast %cst_6 : f32 to vector<1x256xf32>
    %9 = arith.minimumf %7, %8 : vector<1x256xf32>
    %c0_7 = arith.constant 0 : index
    %c0_8 = arith.constant 0 : index
    %10 = vector.load %arg3[%c0_7, %c0_8] : memref<1x256xf32, #tpu.memory_space<vmem>>, vector<1x256xf32>
    tpu.vector_store %arg3[%c0_7, %c0_8], %9 {strides = array<i32>} : memref<1x256xf32, #tpu.memory_space<vmem>>, vector<1x256xf32>,
    return
  }
}

</mosaic_0001>

<llo_original>
// kernel: tpu_custom_call.1
$region0: #{tpu_custom_call.1}
  #allocation0 [shape = 'u32[]', space=smem, size = 0x4, offset = 0x4, fixed_abs, tag = 'smem constant byte address 0x4 - core index']
  #allocation1 [shape = 'u32[72,128]{1,0:T(1,128)}', space=vmem, size = 0x9000, scoped, tag = 'internal scratch']
  %s0 = inlined_call_operand.hbm [shape: f32[1,768], index: 0, kind: input, shape index: {}]
  %s1 = inlined_call_operand.hbm [shape: bf16[768,256], index: 1, kind: input, shape index: {}]
  %s2 = inlined_call_operand.hbm [shape: f32[1,256], index: 2, kind: input, shape index: {}]
  %s3 = inlined_call_operand.hbm [shape: f32[1,256], index: 3, kind: output, shape index: {}]
  %s4 = sld [smem:[#allocation0]]
  $region34: #{tpu_custom_call.1} parent=0
    _
  %s6 = ssub.s32 1, %s4
  %s7 = scalar_select 0, %s6, %s4
  $region1: #{tpu_custom_call.1} parent=0
    #allocation2 [shape = 'u8[3072]{0}', space=vmem, size = 0xc00, scoped, tag = 'input window, operand 0, single buffered']
    #allocation3 [shape = 's32[1]{0}', space=sflag, size = 0x4, scoped, tag = 'scoped memory for tpu_custom_call.1']
    #allocation4 [shape = 's32[1]{0}', space=sflag, size = 0x4, scoped, tag = 'scoped memory for tpu_custom_call.1']
    #allocation5 [shape = 'u8[393216]{0}', space=vmem, size = 0x60000, scoped, tag = 'input window, operand 1, single buffered']
    #allocation6 [shape = 's32[1]{0}', space=sflag, size = 0x4, scoped, tag = 'scoped memory for tpu_custom_call.1']
    #allocation7 [shape = 'u8[1024]{0}', space=vmem, size = 0x400, scoped, tag = 'input window, operand 2, single buffered']
    #allocation8 [shape = 'u8[1024]{0}', space=vmem, size = 0x400, scoped, tag = 'output window, operand 0, single buffered']
    %8 = vsyncpa [#allocation3], 0
    %9 = vsyncpa [#allocation6], 0
    %10 = vsyncpa [#allocation4], 0
    // Predicated region
    $region2: #{tpu_custom_call.1} parent=1 // pred_check
      _
    $region3: #{tpu_custom_call.1} parent=1 // pred_check_branch
      %12 = sbr.rel (0) target = $region5
    $region4: #{tpu_custom_call.1} parent=1 // pred_region
      %14 = vsyncadd [#allocation3], 0
      %s16 = sshll.u32 %s0, 4
      %s17 = int_to_ptr.hbm [resolvable:$true] %s16
      %s18 = sshll.u32 [#allocation2], 4
      %s19 = int_to_ptr.vmem [resolvable:$true] %s18
      %21 = dma.hbm_to_vmem [thread:$0]  %s17, 96, %s19, [#allocation3]
    $region5: #{tpu_custom_call.1} parent=1 // pred_fallthru
      _
    // Predicated region
    $region6: #{tpu_custom_call.1} parent=1 // pred_check
      _
    $region7: #{tpu_custom_call.1} parent=1 // pred_check_branch
      %23 = sbr.rel (0) target = $region9
    $region8: #{tpu_custom_call.1} parent=1 // pred_region
      %25 = vsyncadd [#allocation6], 0
      %s26 = sshll.u32 %s1, 4
      %s27 = int_to_ptr.hbm [resolvable:$true] %s26
      %s28 = sshll.u32 [#allocation5], 4
      %s29 = int_to_ptr.vmem [resolvable:$true] %s28
      %34 = dma.hbm_to_vmem [thread:$0]  %s27, 12288, %s29, [#allocation6], 128, 128, 8
    $region9: #{tpu_custom_call.1} parent=1 // pred_fallthru
      _
    // Predicated region
    $region10: #{tpu_custom_call.1} parent=1 // pred_check
      _
    $region11: #{tpu_custom_call.1} parent=1 // pred_check_branch
      %36 = sbr.rel (0) target = $region13
    $region12: #{tpu_custom_call.1} parent=1 // pred_region
      %38 = vsyncadd [#allocation6], 0
      %s40 = sshll.u32 %s2, 4
      %s41 = int_to_ptr.hbm [resolvable:$true] %s40
      %s42 = sshll.u32 [#allocation7], 4
      %s43 = int_to_ptr.vmem [resolvable:$true] %s42
      %45 = dma.hbm_to_vmem [thread:$0]  %s41, 32, %s43, [#allocation6]
    $region13: #{tpu_custom_call.1} parent=1 // pred_fallthru
      _
    // Predicated region
    $region14: #{tpu_custom_call.1} parent=1 // pred_check
      _
    $region15: #{tpu_custom_call.1} parent=1 // pred_check_branch
      %47 = sbr.rel (0) target = $region17
    $region16: #{tpu_custom_call.1} parent=1 // pred_region
      %49 = dma.done [#allocation3], 96
    $region17: #{tpu_custom_call.1} parent=1 // pred_fallthru
      _
    // Predicated region
    $region18: #{tpu_custom_call.1} parent=1 // pred_check
      _
    $region19: #{tpu_custom_call.1} parent=1 // pred_check_branch
      %51 = sbr.rel (0) target = $region21
    $region20: #{tpu_custom_call.1} parent=1 // pred_region
      %53 = dma.done [#allocation6], 12288
    $region21: #{tpu_custom_call.1} parent=1 // pred_fallthru
      _
    // Predicated region
    $region22: #{tpu_custom_call.1} parent=1 // pred_check
      _
    $region23: #{tpu_custom_call.1} parent=1 // pred_check_branch
      %55 = sbr.rel (0) target = $region25
    $region24: #{tpu_custom_call.1} parent=1 // pred_region
      %57 = dma.done [#allocation6], 32
    $region25: #{tpu_custom_call.1} parent=1 // pred_fallthru
      _
    %v58 = vld [vmem:[#allocation2] sm:$0x3f]
    %v60 = vperm.slane %v58, 0
    %v61 = vperm.slane %v58, 1
    %v62 = vperm.slane %v58, 2
    %v63 = vperm.slane %v58, 3
    %v64 = vperm.slane %v58, 4
    %v65 = vperm.slane %v58, 5
    %v72 = vpack.c.bf16 %v60, %v60
    %v73 = vpack.c.bf16 %v61, %v61
    %v74 = vpack.c.bf16 %v62, %v62
    %v75 = vpack.c.bf16 %v63, %v63
    %v76 = vpack.c.bf16 %v64, %v64
    %v77 = vpack.c.bf16 %v65, %v65
    %v78 = vld [vmem:[#allocation5] sm:$0xff]
    %v79 = vld [vmem:[#allocation5 + $0x8] sm:$0xff]
    %v80 = vld [vmem:[#allocation5 + $0x10] sm:$0xff]
    %v81 = vld [vmem:[#allocation5 + $0x18] sm:$0xff]
    %v82 = vld [vmem:[#allocation5 + $0x20] sm:$0xff]
    %v83 = vld [vmem:[#allocation5 + $0x28] sm:$0xff]
    %v84 = vld [vmem:[#allocation5 + $0x30] sm:$0xff]
    %v85 = vld [vmem:[#allocation5 + $0x38] sm:$0xff]
    %v86 = vld [vmem:[#allocation5 + $0x40] sm:$0xff]
    %v87 = vld [vmem:[#allocation5 + $0x48] sm:$0xff]
    %v88 = vld [vmem:[#allocation5 + $0x50] sm:$0xff]
    %v89 = vld [vmem:[#allocation5 + $0x58] sm:$0xff]
    %v90 = vld [vmem:[#allocation5 + $0x60] sm:$0xff]
    %v91 = vld [vmem:[#allocation5 + $0x68] sm:$0xff]
    %v92 = vld [vmem:[#allocation5 + $0x70] sm:$0xff]
    %v93 = vld [vmem:[#allocation5 + $0x78] sm:$0xff]
    %v94 = vld [vmem:[#allocation5 + $0x80] sm:$0xff]
    %v95 = vld [vmem:[#allocation5 + $0x88] sm:$0xff]
    %v96 = vld [vmem:[#allocation5 + $0x90] sm:$0xff]
    %v97 = vld [vmem:[#allocation5 + $0x98] sm:$0xff]
    %v98 = vld [vmem:[#allocation5 + $0xa0] sm:$0xff]
    %v99 = vld [vmem:[#allocation5 + $0xa8] sm:$0xff]
    %v100 = vld [vmem:[#allocation5 + $0xb0] sm:$0xff]
    %v101 = vld [vmem:[#allocation5 + $0xb8] sm:$0xff]
    %v102 = vld [vmem:[#allocation5 + $0xc0] sm:$0xff]
    %v103 = vld [vmem:[#allocation5 + $0xc8] sm:$0xff]
    %v104 = vld [vmem:[#allocation5 + $0xd0] sm:$0xff]
    %v105 = vld [vmem:[#allocation5 + $0xd8] sm:$0xff]
    %v106 = vld [vmem:[#allocation5 + $0xe0] sm:$0xff]
    %v107 = vld [vmem:[#allocation5 + $0xe8] sm:$0xff]
    %v108 = vld [vmem:[#allocation5 + $0xf0] sm:$0xff]
    %v109 = vld [vmem:[#allocation5 + $0xf8] sm:$0xff]
    %v110 = vld [vmem:[#allocation5 + $0x100] sm:$0xff]
    %v111 = vld [vmem:[#allocation5 + $0x108] sm:$0xff]
    %v112 = vld [vmem:[#allocation5 + $0x110] sm:$0xff]
    %v113 = vld [vmem:[#allocation5 + $0x118] sm:$0xff]
    %v114 = vld [vmem:[#allocation5 + $0x120] sm:$0xff]
    %v115 = vld [vmem:[#allocation5 + $0x128] sm:$0xff]
    %v116 = vld [vmem:[#allocation5 + $0x130] sm:$0xff]
    %v117 = vld [vmem:[#allocation5 + $0x138] sm:$0xff]
    %v118 = vld [vmem:[#allocation5 + $0x140] sm:$0xff]
    %v119 = vld [vmem:[#allocation5 + $0x148] sm:$0xff]
    %v120 = vld [vmem:[#allocation5 + $0x150] sm:$0xff]
    %v121 = vld [vmem:[#allocation5 + $0x158] sm:$0xff]
    %v122 = vld [vmem:[#allocation5 + $0x160] sm:$0xff]
    %v123 = vld [vmem:[#allocation5 + $0x168] sm:$0xff]
    %v124 = vld [vmem:[#allocation5 + $0x170] sm:$0xff]
    %v125 = vld [vmem:[#allocation5 + $0x178] sm:$0xff]
    %v126 = vld [vmem:[#allocation5 + $0x180] sm:$0xff]
    %v127 = vld [vmem:[#allocation5 + $0x188] sm:$0xff]
    %v128 = vld [vmem:[#allocation5 + $0x190] sm:$0xff]
    %v129 = vld [vmem:[#allocation5 + $0x198] sm:$0xff]
    %v130 = vld [vmem:[#allocation5 + $0x1a0] sm:$0xff]
    %v131 = vld [vmem:[#allocation5 + $0x1a8] sm:$0xff]
    %v132 = vld [vmem:[#allocation5 + $0x1b0] sm:$0xff]
    %v133 = vld [vmem:[#allocation5 + $0x1b8] sm:$0xff]
    %v134 = vld [vmem:[#allocation5 + $0x1c0] sm:$0xff]
    %v135 = vld [vmem:[#allocation5 + $0x1c8] sm:$0xff]
    %v136 = vld [vmem:[#allocation5 + $0x1d0] sm:$0xff]
    %v137 = vld [vmem:[#allocation5 + $0x1d8] sm:$0xff]
    %v138 = vld [vmem:[#allocation5 + $0x1e0] sm:$0xff]
    %v139 = vld [vmem:[#allocation5 + $0x1e8] sm:$0xff]
    %v140 = vld [vmem:[#allocation5 + $0x1f0] sm:$0xff]
    %v141 = vld [vmem:[#allocation5 + $0x1f8] sm:$0xff]
    %v142 = vld [vmem:[#allocation5 + $0x200] sm:$0xff]
    %v143 = vld [vmem:[#allocation5 + $0x208] sm:$0xff]
    %v144 = vld [vmem:[#allocation5 + $0x210] sm:$0xff]
    %v145 = vld [vmem:[#allocation5 + $0x218] sm:$0xff]
    %v146 = vld [vmem:[#allocation5 + $0x220] sm:$0xff]
    %v147 = vld [vmem:[#allocation5 + $0x228] sm:$0xff]
    %v148 = vld [vmem:[#allocation5 + $0x230] sm:$0xff]
    %v149 = vld [vmem:[#allocation5 + $0x238] sm:$0xff]
    %v150 = vld [vmem:[#allocation5 + $0x240] sm:$0xff]
    %v151 = vld [vmem:[#allocation5 + $0x248] sm:$0xff]
    %v152 = vld [vmem:[#allocation5 + $0x250] sm:$0xff]
    %v153 = vld [vmem:[#allocation5 + $0x258] sm:$0xff]
    %v154 = vld [vmem:[#allocation5 + $0x260] sm:$0xff]
    %v155 = vld [vmem:[#allocation5 + $0x268] sm:$0xff]
    %v156 = vld [vmem:[#allocation5 + $0x270] sm:$0xff]
    %v157 = vld [vmem:[#allocation5 + $0x278] sm:$0xff]
    %v158 = vld [vmem:[#allocation5 + $0x280] sm:$0xff]
    %v159 = vld [vmem:[#allocation5 + $0x288] sm:$0xff]
    %v160 = vld [vmem:[#allocation5 + $0x290] sm:$0xff]
    %v161 = vld [vmem:[#allocation5 + $0x298] sm:$0xff]
    %v162 = vld [vmem:[#allocation5 + $0x2a0] sm:$0xff]
    %v163 = vld [vmem:[#allocation5 + $0x2a8] sm:$0xff]
    %v164 = vld [vmem:[#allocation5 + $0x2b0] sm:$0xff]
    %v165 = vld [vmem:[#allocation5 + $0x2b8] sm:$0xff]
    %v166 = vld [vmem:[#allocation5 + $0x2c0] sm:$0xff]
    %v167 = vld [vmem:[#allocation5 + $0x2c8] sm:$0xff]
    %v168 = vld [vmem:[#allocation5 + $0x2d0] sm:$0xff]
    %v169 = vld [vmem:[#allocation5 + $0x2d8] sm:$0xff]
    %v170 = vld [vmem:[#allocation5 + $0x2e0] sm:$0xff]
    %v171 = vld [vmem:[#allocation5 + $0x2e8] sm:$0xff]
    %v172 = vld [vmem:[#allocation5 + $0x2f0] sm:$0xff]
    %v173 = vld [vmem:[#allocation5 + $0x2f8] sm:$0xff]
    %v174 = vld [vmem:[#allocation7] sm:$0x3]
    %v271 = vunpack.c.l.b16 %v78
    %v272 = vunpack.c.h.b16 %v78
    %v273 = vunpack.c.l.b16 %v79
    %v274 = vunpack.c.h.b16 %v79
    %v275 = vunpack.c.l.b16 %v80
    %v276 = vunpack.c.h.b16 %v80
    %v277 = vunpack.c.l.b16 %v81
    %v278 = vunpack.c.h.b16 %v81
    %v279 = vunpack.c.l.b16 %v82
    %v280 = vunpack.c.h.b16 %v82
    %v281 = vunpack.c.l.b16 %v83
    %v282 = vunpack.c.h.b16 %v83
    %v283 = vunpack.c.l.b16 %v84
    %v284 = vunpack.c.h.b16 %v84
    %v285 = vunpack.c.l.b16 %v85
    %v286 = vunpack.c.h.b16 %v85
    %v287 = vunpack.c.l.b16 %v86
    %v288 = vunpack.c.h.b16 %v86
    %v289 = vunpack.c.l.b16 %v87
    %v290 = vunpack.c.h.b16 %v87
    %v291 = vunpack.c.l.b16 %v88
    %v292 = vunpack.c.h.b16 %v88
    %v293 = vunpack.c.l.b16 %v89
    %v294 = vunpack.c.h.b16 %v89
    %v295 = vunpack.c.l.b16 %v90
    %v296 = vunpack.c.h.b16 %v90
    %v297 = vunpack.c.l.b16 %v91
    %v298 = vunpack.c.h.b16 %v91
    %v299 = vunpack.c.l.b16 %v92
    %v300 = vunpack.c.h.b16 %v92
    %v301 = vunpack.c.l.b16 %v93
    %v302 = vunpack.c.h.b16 %v93
    %v303 = vunpack.c.l.b16 %v94
    %v304 = vunpack.c.h.b16 %v94
    %v305 = vunpack.c.l.b16 %v95
    %v306 = vunpack.c.h.b16 %v95
    %v307 = vunpack.c.l.b16 %v96
    %v308 = vunpack.c.h.b16 %v96
    %v309 = vunpack.c.l.b16 %v97
    %v310 = vunpack.c.h.b16 %v97
    %v311 = vunpack.c.l.b16 %v98
    %v312 = vunpack.c.h.b16 %v98
    %v313 = vunpack.c.l.b16 %v99
    %v314 = vunpack.c.h.b16 %v99
    %v315 = vunpack.c.l.b16 %v100
    %v316 = vunpack.c.h.b16 %v100
    %v317 = vunpack.c.l.b16 %v101
    %v318 = vunpack.c.h.b16 %v101
    %v319 = vunpack.c.l.b16 %v102
    %v320 = vunpack.c.h.b16 %v102
    %v321 = vunpack.c.l.b16 %v103
    %v322 = vunpack.c.h.b16 %v103
    %v323 = vunpack.c.l.b16 %v104
    %v324 = vunpack.c.h.b16 %v104
    %v325 = vunpack.c.l.b16 %v105
    %v326 = vunpack.c.h.b16 %v105
    %v327 = vunpack.c.l.b16 %v106
    %v328 = vunpack.c.h.b16 %v106
    %v329 = vunpack.c.l.b16 %v107
    %v330 = vunpack.c.h.b16 %v107
    %v331 = vunpack.c.l.b16 %v108
    %v332 = vunpack.c.h.b16 %v108
    %v333 = vunpack.c.l.b16 %v109
    %v334 = vunpack.c.h.b16 %v109
    %v335 = vunpack.c.l.b16 %v110
    %v336 = vunpack.c.h.b16 %v110
    %v337 = vunpack.c.l.b16 %v111
    %v338 = vunpack.c.h.b16 %v111
    %v339 = vunpack.c.l.b16 %v112
    %v340 = vunpack.c.h.b16 %v112
    %v341 = vunpack.c.l.b16 %v113
    %v342 = vunpack.c.h.b16 %v113
    %v343 = vunpack.c.l.b16 %v114
    %v344 = vunpack.c.h.b16 %v114
    %v345 = vunpack.c.l.b16 %v115
    %v346 = vunpack.c.h.b16 %v115
    %v347 = vunpack.c.l.b16 %v116
    %v348 = vunpack.c.h.b16 %v116
    %v349 = vunpack.c.l.b16 %v117
    %v350 = vunpack.c.h.b16 %v117
    %v351 = vunpack.c.l.b16 %v118
    %v352 = vunpack.c.h.b16 %v118
    %v353 = vunpack.c.l.b16 %v119
    %v354 = vunpack.c.h.b16 %v119
    %v355 = vunpack.c.l.b16 %v120
    %v356 = vunpack.c.h.b16 %v120
    %v357 = vunpack.c.l.b16 %v121
    %v358 = vunpack.c.h.b16 %v121
    %v359 = vunpack.c.l.b16 %v122
    %v360 = vunpack.c.h.b16 %v122
    %v361 = vunpack.c.l.b16 %v123
    %v362 = vunpack.c.h.b16 %v123
    %v363 = vunpack.c.l.b16 %v124
    %v364 = vunpack.c.h.b16 %v124
    %v365 = vunpack.c.l.b16 %v125
    %v366 = vunpack.c.h.b16 %v125
    %v367 = vunpack.c.l.b16 %v126
    %v368 = vunpack.c.h.b16 %v126
    %v369 = vunpack.c.l.b16 %v127
    %v370 = vunpack.c.h.b16 %v127
    %v371 = vunpack.c.l.b16 %v128
    %v372 = vunpack.c.h.b16 %v128
    %v373 = vunpack.c.l.b16 %v129
    %v374 = vunpack.c.h.b16 %v129
    %v375 = vunpack.c.l.b16 %v130
    %v376 = vunpack.c.h.b16 %v130
    %v377 = vunpack.c.l.b16 %v131
    %v378 = vunpack.c.h.b16 %v131
    %v379 = vunpack.c.l.b16 %v132
    %v380 = vunpack.c.h.b16 %v132
    %v381 = vunpack.c.l.b16 %v133
    %v382 = vunpack.c.h.b16 %v133
    %v383 = vunpack.c.l.b16 %v134
    %v384 = vunpack.c.h.b16 %v134
    %v385 = vunpack.c.l.b16 %v135
    %v386 = vunpack.c.h.b16 %v135
    %v387 = vunpack.c.l.b16 %v136
    %v388 = vunpack.c.h.b16 %v136
    %v389 = vunpack.c.l.b16 %v137
    %v390 = vunpack.c.h.b16 %v137
    %v391 = vunpack.c.l.b16 %v138
    %v392 = vunpack.c.h.b16 %v138
    %v393 = vunpack.c.l.b16 %v139
    %v394 = vunpack.c.h.b16 %v139
    %v395 = vunpack.c.l.b16 %v140
    %v396 = vunpack.c.h.b16 %v140
    %v397 = vunpack.c.l.b16 %v141
    %v398 = vunpack.c.h.b16 %v141
    %v399 = vunpack.c.l.b16 %v142
    %v400 = vunpack.c.h.b16 %v142
    %v401 = vunpack.c.l.b16 %v143
    %v402 = vunpack.c.h.b16 %v143
    %v403 = vunpack.c.l.b16 %v144
    %v404 = vunpack.c.h.b16 %v144
    %v405 = vunpack.c.l.b16 %v145
    %v406 = vunpack.c.h.b16 %v145
    %v407 = vunpack.c.l.b16 %v146
    %v408 = vunpack.c.h.b16 %v146
    %v409 = vunpack.c.l.b16 %v147
    %v410 = vunpack.c.h.b16 %v147
    %v411 = vunpack.c.l.b16 %v148
    %v412 = vunpack.c.h.b16 %v148
    %v413 = vunpack.c.l.b16 %v149
    %v414 = vunpack.c.h.b16 %v149
    %v415 = vunpack.c.l.b16 %v150
    %v416 = vunpack.c.h.b16 %v150
    %v417 = vunpack.c.l.b16 %v151
    %v418 = vunpack.c.h.b16 %v151
    %v419 = vunpack.c.l.b16 %v152
    %v420 = vunpack.c.h.b16 %v152
    %v421 = vunpack.c.l.b16 %v153
    %v422 = vunpack.c.h.b16 %v153
    %v423 = vunpack.c.l.b16 %v154
    %v424 = vunpack.c.h.b16 %v154
    %v425 = vunpack.c.l.b16 %v155
    %v426 = vunpack.c.h.b16 %v155
    %v427 = vunpack.c.l.b16 %v156
    %v428 = vunpack.c.h.b16 %v156
    %v429 = vunpack.c.l.b16 %v157
    %v430 = vunpack.c.h.b16 %v157
    %v431 = vunpack.c.l.b16 %v158
    %v432 = vunpack.c.h.b16 %v158
    %v433 = vunpack.c.l.b16 %v159
    %v434 = vunpack.c.h.b16 %v159
    %v435 = vunpack.c.l.b16 %v160
    %v436 = vunpack.c.h.b16 %v160
    %v437 = vunpack.c.l.b16 %v161
    %v438 = vunpack.c.h.b16 %v161
    %v439 = vunpack.c.l.b16 %v162
    %v440 = vunpack.c.h.b16 %v162
    %v441 = vunpack.c.l.b16 %v163
    %v442 = vunpack.c.h.b16 %v163
    %v443 = vunpack.c.l.b16 %v164
    %v444 = vunpack.c.h.b16 %v164
    %v445 = vunpack.c.l.b16 %v165
    %v446 = vunpack.c.h.b16 %v165
    %v447 = vunpack.c.l.b16 %v166
    %v448 = vunpack.c.h.b16 %v166
    %v449 = vunpack.c.l.b16 %v167
    %v450 = vunpack.c.h.b16 %v167
    %v451 = vunpack.c.l.b16 %v168
    %v452 = vunpack.c.h.b16 %v168
    %v453 = vunpack.c.l.b16 %v169
    %v454 = vunpack.c.h.b16 %v169
    %v455 = vunpack.c.l.b16 %v170
    %v456 = vunpack.c.h.b16 %v170
    %v457 = vunpack.c.l.b16 %v171
    %v458 = vunpack.c.h.b16 %v171
    %v459 = vunpack.c.l.b16 %v172
    %v460 = vunpack.c.h.b16 %v172
    %v461 = vunpack.c.l.b16 %v173
    %v462 = vunpack.c.h.b16 %v173
    %v463 = vpack.c.b16 %v273, %v271
    %v464 = vpack.c.b16 %v274, %v272
    %v465 = vpack.c.b16 %v277, %v275
    %v466 = vpack.c.b16 %v278, %v276
    %v467 = vpack.c.b16 %v281, %v279
    %v468 = vpack.c.b16 %v282, %v280
    %v469 = vpack.c.b16 %v285, %v283
    %v470 = vpack.c.b16 %v286, %v284
    %v471 = vpack.c.b16 %v289, %v287
    %v472 = vpack.c.b16 %v290, %v288
    %v473 = vpack.c.b16 %v293, %v291
    %v474 = vpack.c.b16 %v294, %v292
    %v475 = vpack.c.b16 %v297, %v295
    %v476 = vpack.c.b16 %v298, %v296
    %v477 = vpack.c.b16 %v301, %v299
    %v478 = vpack.c.b16 %v302, %v300
    %v479 = vpack.c.b16 %v305, %v303
    %v480 = vpack.c.b16 %v306, %v304
    %v481 = vpack.c.b16 %v309, %v307
    %v482 = vpack.c.b16 %v310, %v308
    %v483 = vpack.c.b16 %v313, %v311
    %v484 = vpack.c.b16 %v314, %v312
    %v485 = vpack.c.b16 %v317, %v315
    %v486 = vpack.c.b16 %v318, %v316
    %v487 = vpack.c.b16 %v321, %v319
    %v488 = vpack.c.b16 %v322, %v320
    %v489 = vpack.c.b16 %v325, %v323
    %v490 = vpack.c.b16 %v326, %v324
    %v491 = vpack.c.b16 %v329, %v327
    %v492 = vpack.c.b16 %v330, %v328
    %v493 = vpack.c.b16 %v333, %v331
    %v494 = vpack.c.b16 %v334, %v332
    %v495 = vpack.c.b16 %v337, %v335
    %v496 = vpack.c.b16 %v338, %v336
    %v497 = vpack.c.b16 %v341, %v339
    %v498 = vpack.c.b16 %v342, %v340
    %v499 = vpack.c.b16 %v345, %v343
    %v500 = vpack.c.b16 %v346, %v344
    %v501 = vpack.c.b16 %v349, %v347
    %v502 = vpack.c.b16 %v350, %v348
    %v503 = vpack.c.b16 %v353, %v351
    %v504 = vpack.c.b16 %v354, %v352
    %v505 = vpack.c.b16 %v357, %v355
    %v506 = vpack.c.b16 %v358, %v356
    %v507 = vpack.c.b16 %v361, %v359
    %v508 = vpack.c.b16 %v362, %v360
    %v509 = vpack.c.b16 %v365, %v363
    %v510 = vpack.c.b16 %v366, %v364
    %v511 = vpack.c.b16 %v369, %v367
    %v512 = vpack.c.b16 %v370, %v368
    %v513 = vpack.c.b16 %v373, %v371
    %v514 = vpack.c.b16 %v374, %v372
    %v515 = vpack.c.b16 %v377, %v375
    %v516 = vpack.c.b16 %v378, %v376
    %v517 = vpack.c.b16 %v381, %v379
    %v518 = vpack.c.b16 %v382, %v380
    %v519 = vpack.c.b16 %v385, %v383
    %v520 = vpack.c.b16 %v386, %v384
    %v521 = vpack.c.b16 %v389, %v387
    %v522 = vpack.c.b16 %v390, %v388
    %v523 = vpack.c.b16 %v393, %v391
    %v524 = vpack.c.b16 %v394, %v392
    %v525 = vpack.c.b16 %v397, %v395
    %v526 = vpack.c.b16 %v398, %v396
    %v527 = vpack.c.b16 %v401, %v399
    %v528 = vpack.c.b16 %v402, %v400
    %v529 = vpack.c.b16 %v405, %v403
    %v530 = vpack.c.b16 %v406, %v404
    %v531 = vpack.c.b16 %v409, %v407
    %v532 = vpack.c.b16 %v410, %v408
    %v533 = vpack.c.b16 %v413, %v411
    %v534 = vpack.c.b16 %v414, %v412
    %v535 = vpack.c.b16 %v417, %v415
    %v536 = vpack.c.b16 %v418, %v416
    %v537 = vpack.c.b16 %v421, %v419
    %v538 = vpack.c.b16 %v422, %v420
    %v539 = vpack.c.b16 %v425, %v423
    %v540 = vpack.c.b16 %v426, %v424
    %v541 = vpack.c.b16 %v429, %v427
    %v542 = vpack.c.b16 %v430, %v428
    %v543 = vpack.c.b16 %v433, %v431
    %v544 = vpack.c.b16 %v434, %v432
    %v545 = vpack.c.b16 %v437, %v435
    %v546 = vpack.c.b16 %v438, %v436
    %v547 = vpack.c.b16 %v441, %v439
    %v548 = vpack.c.b16 %v442, %v440
    %v549 = vpack.c.b16 %v445, %v443
    %v550 = vpack.c.b16 %v446, %v444
    %v551 = vpack.c.b16 %v449, %v447
    %v552 = vpack.c.b16 %v450, %v448
    %v553 = vpack.c.b16 %v453, %v451
    %v554 = vpack.c.b16 %v454, %v452
    %v555 = vpack.c.b16 %v457, %v455
    %v556 = vpack.c.b16 %v458, %v456
    %v557 = vpack.c.b16 %v461, %v459
    %v558 = vpack.c.b16 %v462, %v460
    %v656 = vperm.slane %v174, 0
    %v657 = vperm.slane %v174, 1
    %660 = vmatpush.bf16.msra.mxu0 %v477
    %661 = vmatpush.bf16.msra.mxu0 %v475
    %662 = vmatpush.bf16.msra.mxu0 %v473
    %663 = vmatpush.bf16.msra.mxu0 %v471
    %664 = vmatpush.bf16.msra.mxu0 %v469
    %665 = vmatpush.bf16.msra.mxu0 %v467
    %666 = vmatpush.bf16.msra.mxu0 %v465
    %667 = vmatpush.bf16.msra.mxu0 %v463
    %668 = vmatmul.bf16.gmra.mxu0 %v72
    %v669 = vpop.f32.mrf.mxu0
    %v670 = vadd.f32 %v656, %v669
    %v671 = vpop.f32.mrf.mxu0
    %672 = vdwg.mxu0
    %673 = vmatpush.bf16.msra.mxu0 %v493
    %674 = vmatpush.bf16.msra.mxu0 %v491
    %675 = vmatpush.bf16.msra.mxu0 %v489
    %676 = vmatpush.bf16.msra.mxu0 %v487
    %677 = vmatpush.bf16.msra.mxu0 %v485
    %678 = vmatpush.bf16.msra.mxu0 %v483
    %679 = vmatpush.bf16.msra.mxu0 %v481
    %680 = vmatpush.bf16.msra.mxu0 %v479
    %681 = vmatmul.bf16.gmra.mxu0 %v73
    %v682 = vpop.f32.mrf.mxu0
    %v683 = vadd.f32 %v670, %v682
    %v684 = vpop.f32.mrf.mxu0
    %685 = vdwg.mxu0
    %686 = vmatpush.bf16.msra.mxu0 %v509
    %687 = vmatpush.bf16.msra.mxu0 %v507
    %688 = vmatpush.bf16.msra.mxu0 %v505
    %689 = vmatpush.bf16.msra.mxu0 %v503
    %690 = vmatpush.bf16.msra.mxu0 %v501
    %691 = vmatpush.bf16.msra.mxu0 %v499
    %692 = vmatpush.bf16.msra.mxu0 %v497
    %693 = vmatpush.bf16.msra.mxu0 %v495
    %694 = vmatmul.bf16.gmra.mxu0 %v74
    %v695 = vpop.f32.mrf.mxu0
    %v696 = vadd.f32 %v683, %v695
    %v697 = vpop.f32.mrf.mxu0
    %698 = vdwg.mxu0
    %699 = vmatpush.bf16.msra.mxu0 %v525
    %700 = vmatpush.bf16.msra.mxu0 %v523
    %701 = vmatpush.bf16.msra.mxu0 %v521
    %702 = vmatpush.bf16.msra.mxu0 %v519
    %703 = vmatpush.bf16.msra.mxu0 %v517
    %704 = vmatpush.bf16.msra.mxu0 %v515
    %705 = vmatpush.bf16.msra.mxu0 %v513
    %706 = vmatpush.bf16.msra.mxu0 %v511
    %707 = vmatmul.bf16.gmra.mxu0 %v75
    %v708 = vpop.f32.mrf.mxu0
    %v709 = vadd.f32 %v696, %v708
    %v710 = vpop.f32.mrf.mxu0
    %711 = vdwg.mxu0
    %712 = vmatpush.bf16.msra.mxu0 %v541
    %713 = vmatpush.bf16.msra.mxu0 %v539
    %714 = vmatpush.bf16.msra.mxu0 %v537
    %715 = vmatpush.bf16.msra.mxu0 %v535
    %716 = vmatpush.bf16.msra.mxu0 %v533
    %717 = vmatpush.bf16.msra.mxu0 %v531
    %718 = vmatpush.bf16.msra.mxu0 %v529
    %719 = vmatpush.bf16.msra.mxu0 %v527
    %720 = vmatmul.bf16.gmra.mxu0 %v76
    %v721 = vpop.f32.mrf.mxu0
    %v722 = vadd.f32 %v709, %v721
    %v723 = vpop.f32.mrf.mxu0
    %724 = vdwg.mxu0
    %725 = vmatpush.bf16.msra.mxu0 %v557
    %726 = vmatpush.bf16.msra.mxu0 %v555
    %727 = vmatpush.bf16.msra.mxu0 %v553
    %728 = vmatpush.bf16.msra.mxu0 %v551
    %729 = vmatpush.bf16.msra.mxu0 %v549
    %730 = vmatpush.bf16.msra.mxu0 %v547
    %731 = vmatpush.bf16.msra.mxu0 %v545
    %732 = vmatpush.bf16.msra.mxu0 %v543
    %733 = vmatmul.bf16.gmra.mxu0 %v77
    %v734 = vpop.f32.mrf.mxu0
    %v735 = vadd.f32 %v722, %v734
    %v736 = vpop.f32.mrf.mxu0
    %737 = vdwg.mxu0
    %738 = vmatpush.bf16.msra.mxu0 %v478
    %739 = vmatpush.bf16.msra.mxu0 %v476
    %740 = vmatpush.bf16.msra.mxu0 %v474
    %741 = vmatpush.bf16.msra.mxu0 %v472
    %742 = vmatpush.bf16.msra.mxu0 %v470
    %743 = vmatpush.bf16.msra.mxu0 %v468
    %744 = vmatpush.bf16.msra.mxu0 %v466
    %745 = vmatpush.bf16.msra.mxu0 %v464
    %746 = vmatmul.bf16.gmra.mxu0 %v72
    %v747 = vpop.f32.mrf.mxu0
    %v748 = vadd.f32 %v657, %v747
    %v749 = vpop.f32.mrf.mxu0
    %750 = vdwg.mxu0
    %751 = vmatpush.bf16.msra.mxu0 %v494
    %752 = vmatpush.bf16.msra.mxu0 %v492
    %753 = vmatpush.bf16.msra.mxu0 %v490
    %754 = vmatpush.bf16.msra.mxu0 %v488
    %755 = vmatpush.bf16.msra.mxu0 %v486
    %756 = vmatpush.bf16.msra.mxu0 %v484
    %757 = vmatpush.bf16.msra.mxu0 %v482
    %758 = vmatpush.bf16.msra.mxu0 %v480
    %759 = vmatmul.bf16.gmra.mxu0 %v73
    %v760 = vpop.f32.mrf.mxu0
    %v761 = vadd.f32 %v748, %v760
    %v762 = vpop.f32.mrf.mxu0
    %763 = vdwg.mxu0
    %764 = vmatpush.bf16.msra.mxu0 %v510
    %765 = vmatpush.bf16.msra.mxu0 %v508
    %766 = vmatpush.bf16.msra.mxu0 %v506
    %767 = vmatpush.bf16.msra.mxu0 %v504
    %768 = vmatpush.bf16.msra.mxu0 %v502
    %769 = vmatpush.bf16.msra.mxu0 %v500
    %770 = vmatpush.bf16.msra.mxu0 %v498
    %771 = vmatpush.bf16.msra.mxu0 %v496
    %772 = vmatmul.bf16.gmra.mxu0 %v74
    %v773 = vpop.f32.mrf.mxu0
    %v774 = vadd.f32 %v761, %v773
    %v775 = vpop.f32.mrf.mxu0
    %776 = vdwg.mxu0
    %777 = vmatpush.bf16.msra.mxu0 %v526
    %778 = vmatpush.bf16.msra.mxu0 %v524
    %779 = vmatpush.bf16.msra.mxu0 %v522
    %780 = vmatpush.bf16.msra.mxu0 %v520
    %781 = vmatpush.bf16.msra.mxu0 %v518
    %782 = vmatpush.bf16.msra.mxu0 %v516
    %783 = vmatpush.bf16.msra.mxu0 %v514
    %784 = vmatpush.bf16.msra.mxu0 %v512
    %785 = vmatmul.bf16.gmra.mxu0 %v75
    %v786 = vpop.f32.mrf.mxu0
    %v787 = vadd.f32 %v774, %v786
    %v788 = vpop.f32.mrf.mxu0
    %789 = vdwg.mxu0
    %790 = vmatpush.bf16.msra.mxu0 %v542
    %791 = vmatpush.bf16.msra.mxu0 %v540
    %792 = vmatpush.bf16.msra.mxu0 %v538
    %793 = vmatpush.bf16.msra.mxu0 %v536
    %794 = vmatpush.bf16.msra.mxu0 %v534
    %795 = vmatpush.bf16.msra.mxu0 %v532
    %796 = vmatpush.bf16.msra.mxu0 %v530
    %797 = vmatpush.bf16.msra.mxu0 %v528
    %798 = vmatmul.bf16.gmra.mxu0 %v76
    %v799 = vpop.f32.mrf.mxu0
    %v800 = vadd.f32 %v787, %v799
    %v801 = vpop.f32.mrf.mxu0
    %802 = vdwg.mxu0
    %803 = vmatpush.bf16.msra.mxu0 %v558
    %804 = vmatpush.bf16.msra.mxu0 %v556
    %805 = vmatpush.bf16.msra.mxu0 %v554
    %806 = vmatpush.bf16.msra.mxu0 %v552
    %807 = vmatpush.bf16.msra.mxu0 %v550
    %808 = vmatpush.bf16.msra.mxu0 %v548
    %809 = vmatpush.bf16.msra.mxu0 %v546
    %810 = vmatpush.bf16.msra.mxu0 %v544
    %811 = vmatmul.bf16.gmra.mxu0 %v77
    %v812 = vpop.f32.mrf.mxu0
    %v813 = vadd.f32 %v800, %v812
    %v814 = vpop.f32.mrf.mxu0
    %815 = vdwg.mxu0
    %v816 = vmax.f32 %v735, 0.05
    %v817 = vmax.f32 %v813, 0.05
    %v818 = vmin.f32 %v816, 0.8
    %v819 = vmin.f32 %v817, 0.8
    %v822 = vrot.slane %v819, 7
    %vm823 = vcmask 1040384
    %v824 = vsel %vm823, %v818, %v822
    %v826 = vlaneseq
    %vm827 = vcmp.ge.s32.totalorder %v826, 0
    %vm828 = vcmp.lt.s32.totalorder %v826, 256
    %vm829 = vmand %vm827, %vm828
    %830 = vst.msk [vmem:[#allocation8] sm:$0x3] %vm829, %v824
    // Predicated region
    $region26: #{tpu_custom_call.1} parent=1 // pred_check
      _
    $region27: #{tpu_custom_call.1} parent=1 // pred_check_branch
      %832 = sbr.rel (0) target = $region29
    $region28: #{tpu_custom_call.1} parent=1 // pred_region
      %834 = vsyncadd [#allocation4], 0
      %s836 = sshll.u32 [#allocation8], 4
      %s837 = int_to_ptr.vmem [resolvable:$true] %s836
      %s838 = sshll.u32 %s3, 4
      %s839 = int_to_ptr.hbm [resolvable:$true] %s838
      %841 = dma.vmem_to_hbm [thread:$0]  %s837, 32, %s839, [#allocation4]
    $region29: #{tpu_custom_call.1} parent=1 // pred_fallthru
      _
    // Predicated region
    $region30: #{tpu_custom_call.1} parent=1 // pred_check
      _
    $region31: #{tpu_custom_call.1} parent=1 // pred_check_branch
      %843 = sbr.rel (0) target = $region33
    $region32: #{tpu_custom_call.1} parent=1 // pred_region
      %845 = dma.done [#allocation4], 32
    $region33: #{tpu_custom_call.1} parent=1 // pred_fallthru
      _
    %846 = vsyncpa [#allocation3], 1
    %847 = vsyncpa [#allocation6], 1
    %848 = vsyncpa [#allocation4], 1

</llo_original>
